<compile_context>
chip_gen: v5e
topology: v5e:2x2
jax: 0.10.0
libtpu: 0.0.40
codegen_flags: <defaults>
</compile_context>

<pallas_src>
import jax
import jax.numpy as jnp
from jax.experimental import pallas as pl
from jax.experimental.pallas import tpu as pltpu


def _se_kernel(x_ref, w1t_ref, b1_ref, w2t_ref, b2_ref, o_ref):
    # x_ref: (TB, C, HW); w1t: (C, Cr) f32; b1: (1, Cr) f32;
    # w2t: (Cr, C) f32;   b2: (1, C)  f32; o_ref: (TB, C, HW)
    hw = x_ref.shape[-1]
    inv_hw = 1.0 / hw

    # Squeeze: per-(image, channel) spatial mean, accumulated in f32.
    mean = jnp.sum(x_ref[...].astype(jnp.float32), axis=-1) * inv_hw     # (TB, C)

    # Excitation, batched over the TB images in this block (MXU).
    z1 = jnp.dot(mean, w1t_ref[...],
                 preferred_element_type=jnp.float32) + b1_ref[...]       # (TB, Cr)
    z1 = jnp.maximum(z1, 0.0)
    z2 = jnp.dot(z1, w2t_ref[...],
                 preferred_element_type=jnp.float32) + b2_ref[...]       # (TB, C)
    gate = jax.nn.sigmoid(z2)                                            # (TB, C)

    # Scale: re-read x_ref (no long-lived f32 block copy) and multiply in the
    # input dtype, broadcasting the gate over the spatial (lane) axis.
    o_ref[...] = x_ref[...] * gate[:, :, None].astype(o_ref.dtype)


def _pick_tb(B, C, HW, itemsize, target_bytes=6 * 1024 * 1024):
    """Batch-tile size: ~a few MB per buffer, >=2 grid steps when B>=2, divides B."""
    per_batch = max(1, C * HW * itemsize)
    cap = max(1, target_bytes // per_batch)
    cap = min(cap, B)
    if B >= 2:
        cap = min(cap, (B + 1) // 2)   # keep at least 2 grid steps (megacore / 2 TCs)
    tb = 1
    for d in range(1, cap + 1):
        if B % d == 0:
            tb = d
    return tb


def se_layer(x, w1, b1, w2, b2):
    """SELayer forward.

    x: (B, C, H, W).  Torch nn.Linear layout: w1 (Cr, C), b1 (Cr,),
    w2 (C, Cr), b2 (C,).
    """
    B, C, H, W = x.shape
    Cr = w1.shape[0]
    HW = H * W
    x_flat = x.reshape(B, C, HW)

    # Pre-transpose + pre-cast weights once in the wrapper so the kernel does
    # (TB, C) @ (C, Cr) and (TB, Cr) @ (Cr, C) in f32 with no per-step casts.
    w1t = jnp.transpose(w1).astype(jnp.float32)          # (C, Cr)
    w2t = jnp.transpose(w2).astype(jnp.float32)          # (Cr, C)
    b1_row = b1.reshape(1, Cr).astype(jnp.float32)       # (1, Cr)
    b2_row = b2.reshape(1, C).astype(jnp.float32)        # (1, C)

    itemsize = jnp.dtype(x.dtype).itemsize
    TB = _pick_tb(B, C, HW, itemsize)
    grid = (B // TB,)

    block_bytes = TB * C * HW * itemsize
    weight_bytes = 4 * (C * Cr * 2 + C + Cr)
    # Double-buffered in + out blocks, resident weights, plus headroom; stay
    # well under v7x's 64 MiB physical VMEM.
    vmem_limit = int(min(48 * 1024 * 1024,
                         max(32 * 1024 * 1024,
                             5 * block_bytes + weight_bytes + (2 << 20))))

    out_flat = pl.pallas_call(
        _se_kernel,
        out_shape=jax.ShapeDtypeStruct((B, C, HW), x.dtype),
        grid_spec=pltpu.PrefetchScalarGridSpec(
            num_scalar_prefetch=0,
            grid=grid,
            in_specs=[
                pl.BlockSpec((TB, C, HW), lambda b: (b, 0, 0)),
                pl.BlockSpec((C, Cr), lambda b: (0, 0)),
                pl.BlockSpec((1, Cr), lambda b: (0, 0)),
                pl.BlockSpec((Cr, C), lambda b: (0, 0)),
                pl.BlockSpec((1, C), lambda b: (0, 0)),
            ],
            out_specs=pl.BlockSpec((TB, C, HW), lambda b: (b, 0, 0)),
        ),
        compiler_params=pltpu.CompilerParams(
            dimension_semantics=("parallel",),
            vmem_limit_bytes=vmem_limit),
    )(x_flat, w1t, b1_row, w2t, b2_row)

    return out_flat.reshape(B, C, H, W)


def _reference(x, w1, b1, w2, b2):
    # Pure-JAX reference of the PyTorch forward.
    y = jnp.mean(x, axis=(2, 3))                       # (B, C)
    y = jnp.maximum(y @ w1.T + b1, 0.0)                # (B, Cr)
    y = jax.nn.sigmoid(y @ w2.T + b2)                  # (B, C)
    return x * y[:, :, None, None]


def _run_case(key, B, C, H, W, reduction):
    Cr = max(1, C // reduction)
    kx, k1, k2, k3, k4 = jax.random.split(key, 5)
    x = jax.random.normal(kx, (B, C, H, W), dtype=jnp.float32)
    # torch nn.Linear weight layout: (out_features, in_features)
    w1 = jax.random.normal(k1, (Cr, C), dtype=jnp.float32) * 0.1
    b1 = jax.random.normal(k2, (Cr,), dtype=jnp.float32) * 0.1
    w2 = jax.random.normal(k3, (C, Cr), dtype=jnp.float32) * 0.1
    b2 = jax.random.normal(k4, (C,), dtype=jnp.float32) * 0.1

    out = se_layer(x, w1, b1, w2, b2)
    out = jax.block_until_ready(out)

    ref = _reference(x, w1, b1, w2, b2)
    assert out.shape == (B, C, H, W)
    assert jnp.allclose(out, ref, atol=1e-5, rtol=1e-5), "mismatch vs reference"


if __name__ == "__main__":
    key = jax.random.PRNGKey(0)
    k0, k1 = jax.random.split(key)

    # Main small case (TB == 1, grid of 2).
    _run_case(k0, B=2, C=32, H=8, W=8, reduction=16)
    # Slightly larger case that exercises TB > 1 (multiple images per block).
    _run_case(k1, B=4, C=64, H=14, W=14, reduction=16)

    print("KERNEL_OK")
</pallas_src>

<mosaic_0001>
module attributes {stable_mosaic.version = 11 : i64} {
  func.func @_se_kernel(%arg0: i32, %arg1: memref<1x32x64xf32, #tpu.memory_space<vmem>>, %arg2: memref<32x2xf32, #tpu.memory_space<vmem>>, %arg3: memref<1x2xf32, #tpu.memory_space<vmem>>, %arg4: memref<2x32xf32, #tpu.memory_space<vmem>>, %arg5: memref<1x32xf32, #tpu.memory_space<vmem>>, %arg6: memref<1x32x64xf32, #tpu.memory_space<vmem>>) attributes {dimension_semantics = [#tpu.dimension_semantics<parallel>], iteration_bounds = array<i64: 2>, scalar_prefetch = 0 : i64, scratch_operands = 0 : i64, tpu.core_type = #tpu.core_type<tc>, window_params = [{transform_indices = @transform_0, window_bounds = array<i64: 1, 32, 64>}, {pipeline_mode = #tpu.pipeline_mode<synchronous>, transform_indices = @transform_1, window_bounds = array<i64: 32, 2>}, {pipeline_mode = #tpu.pipeline_mode<synchronous>, transform_indices = @transform_2, window_bounds = array<i64: 1, 2>}, {pipeline_mode = #tpu.pipeline_mode<synchronous>, transform_indices = @transform_3, window_bounds = array<i64: 2, 32>}, {pipeline_mode = #tpu.pipeline_mode<synchronous>, transform_indices = @transform_4, window_bounds = array<i64: 1, 32>}, {transform_indices = @transform_5, window_bounds = array<i64: 1, 32, 64>}]} {
    %c0 = arith.constant 0 : index
    %c0_0 = arith.constant 0 : index
    %c0_1 = arith.constant 0 : index
    %0 = vector.load %arg1[%c0, %c0_0, %c0_1] : memref<1x32x64xf32, #tpu.memory_space<vmem>>, vector<1x32x64xf32>
    %cst = arith.constant dense<0.000000e+00> : vector<1x32xf32>
    %1 = vector.multi_reduction <add>, %0, %cst [2] : vector<1x32x64xf32> to vector<1x32xf32>
    %cst_2 = arith.constant 1.562500e-02 : f32
    %2 = vector.broadcast %cst_2 : f32 to vector<1x32xf32>
    %3 = arith.mulf %1, %2 : vector<1x32xf32>
    %c0_3 = arith.constant 0 : index
    %c0_4 = arith.constant 0 : index
    %4 = vector.load %arg2[%c0_3, %c0_4] : memref<32x2xf32, #tpu.memory_space<vmem>>, vector<32x2xf32>
    %cst_5 = arith.constant dense<0.000000e+00> : vector<1x2xf32>
    %5 = tpu.matmul %3, %4, %cst_5 {dimension_numbers = #tpu.dot_dimension_numbers<[1], [0], [0], [1], [0, 0, 1, 1], [], []>} : vector<1x32xf32>, vector<32x2xf32>, vector<1x2xf32> -> vector<1x2xf32>
    %c0_6 = arith.constant 0 : index
    %c0_7 = arith.constant 0 : index
    %6 = vector.load %arg3[%c0_6, %c0_7] : memref<1x2xf32, #tpu.memory_space<vmem>>, vector<1x2xf32>
    %7 = arith.addf %5, %6 : vector<1x2xf32>
    %cst_8 = arith.constant 0.000000e+00 : f32
    %8 = vector.broadcast %cst_8 : f32 to vector<1x2xf32>
    %9 = arith.maximumf %7, %8 : vector<1x2xf32>
    %c0_9 = arith.constant 0 : index
    %c0_10 = arith.constant 0 : index
    %10 = vector.load %arg4[%c0_9, %c0_10] : memref<2x32xf32, #tpu.memory_space<vmem>>, vector<2x32xf32>
    %cst_11 = arith.constant dense<0.000000e+00> : vector<1x32xf32>
    %11 = tpu.matmul %9, %10, %cst_11 {dimension_numbers = #tpu.dot_dimension_numbers<[1], [0], [0], [1], [0, 0, 1, 1], [], []>} : vector<1x2xf32>, vector<2x32xf32>, vector<1x32xf32> -> vector<1x32xf32>
    %c0_12 = arith.constant 0 : index
    %c0_13 = arith.constant 0 : index
    %12 = vector.load %arg5[%c0_12, %c0_13] : memref<1x32xf32, #tpu.memory_space<vmem>>, vector<1x32xf32>
    %13 = arith.addf %11, %12 : vector<1x32xf32>
    %14 = arith.negf %13 : vector<1x32xf32>
    %15 = math.exp %14 : vector<1x32xf32>
    %cst_14 = arith.constant 1.000000e+00 : f32
    %16 = vector.broadcast %cst_14 : f32 to vector<1x32xf32>
    %17 = arith.addf %16, %15 : vector<1x32xf32>
    %18 = arith.divf %16, %17 : vector<1x32xf32>
    %c0_15 = arith.constant 0 : index
    %c0_16 = arith.constant 0 : index
    %c0_17 = arith.constant 0 : index
    %19 = vector.load %arg1[%c0_15, %c0_16, %c0_17] : memref<1x32x64xf32, #tpu.memory_space<vmem>>, vector<1x32x64xf32>
    %20 = vector.shape_cast %18 : vector<1x32xf32> to vector<1x32x1xf32>
    %21 = vector.broadcast %20 : vector<1x32x1xf32> to vector<1x32x64xf32>
    %22 = arith.mulf %19, %21 : vector<1x32x64xf32>
    %c0_18 = arith.constant 0 : index
    %c0_19 = arith.constant 0 : index
    %c0_20 = arith.constant 0 : index
    %23 = vector.load %arg6[%c0_18, %c0_19, %c0_20] : memref<1x32x64xf32, #tpu.memory_space<vmem>>, vector<1x32x64xf32>
    tpu.vector_store %arg6[%c0_18, %c0_19, %c0_20], %22 {strides = array<i32>} : memref<1x32x64xf32, #tpu.memory_space<vmem>>, vector<1x32x64xf32>,
    return
  }
  func.func @transform_0(%arg0: i32) -> (i32, i32, i32) {
    %c0_i32 = arith.constant 0 : i32
    %c0_i32_0 = arith.constant 0 : i32
    %c0_i32_1 = arith.constant 0 : i32
    return %arg0, %c0_i32, %c0_i32_0 : i32, i32, i32
  }
  func.func @transform_1(%arg0: i32) -> (i32, i32) {
    %c0_i32 = arith.constant 0 : i32
    %c0_i32_0 = arith.constant 0 : i32
    %c0_i32_1 = arith.constant 0 : i32
    return %c0_i32, %c0_i32_0 : i32, i32
  }
  func.func @transform_2(%arg0: i32) -> (i32, i32) {
    %c0_i32 = arith.constant 0 : i32
    %c0_i32_0 = arith.constant 0 : i32
    %c0_i32_1 = arith.constant 0 : i32
    return %c0_i32, %c0_i32_0 : i32, i32
  }
  func.func @transform_3(%arg0: i32) -> (i32, i32) {
    %c0_i32 = arith.constant 0 : i32
    %c0_i32_0 = arith.constant 0 : i32
    %c0_i32_1 = arith.constant 0 : i32
    return %c0_i32, %c0_i32_0 : i32, i32
  }
  func.func @transform_4(%arg0: i32) -> (i32, i32) {
    %c0_i32 = arith.constant 0 : i32
    %c0_i32_0 = arith.constant 0 : i32
    %c0_i32_1 = arith.constant 0 : i32
    return %c0_i32, %c0_i32_0 : i32, i32
  }
  func.func @transform_5(%arg0: i32) -> (i32, i32, i32) {
    %c0_i32 = arith.constant 0 : i32
    %c0_i32_0 = arith.constant 0 : i32
    %c0_i32_1 = arith.constant 0 : i32
    return %arg0, %c0_i32, %c0_i32_0 : i32, i32, i32
  }
}

</mosaic_0001>

<llo_original>
// kernel: tpu_custom_call.1
$region0: #{tpu_custom_call.1}
  #allocation0 [shape = 'u32[]', space=smem, size = 0x4, offset = 0x4, fixed_abs, tag = 'smem constant byte address 0x4 - core index']
  #allocation1 [shape = 'u32[72,128]{1,0:T(1,128)}', space=vmem, size = 0x9000, scoped, tag = 'internal scratch']
  %s0 = inlined_call_operand.hbm [shape: f32[2,32,64], index: 0, kind: input, shape index: {}]
  %s1 = inlined_call_operand.vmem [shape: f32[32,2], index: 1, kind: input, shape index: {}]
  %s2 = inlined_call_operand.vmem [shape: f32[1,2], index: 2, kind: input, shape index: {}]
  %s3 = inlined_call_operand.vmem [shape: f32[2,32], index: 3, kind: input, shape index: {}]
  %s4 = inlined_call_operand.vmem [shape: f32[1,32], index: 4, kind: input, shape index: {}]
  %s5 = inlined_call_operand.hbm [shape: f32[2,32,64], index: 5, kind: output, shape index: {}]
  %s6 = sld [smem:[#allocation0]]
  $region57: #{tpu_custom_call.1} parent=0
    _
  %s8 = ssub.s32 1, %s6
  %s9 = scalar_select 0, %s8, %s6
  $region1: #{tpu_custom_call.1} parent=0
    #allocation2 [shape = 'u8[32768]{0}', space=vmem, size = 0x8000, scoped, tag = 'input window, operand 0']
    #allocation3 [shape = 's32[2]{0}', space=sflag, size = 0x8, scoped, tag = 'scoped memory for tpu_custom_call.1']
    #allocation4 [shape = 's32[2]{0}', space=sflag, size = 0x8, scoped, tag = 'scoped memory for tpu_custom_call.1']
    #allocation5 [shape = 'u8[32768]{0}', space=vmem, size = 0x8000, scoped, tag = 'output window, operand 0']
    %10 = vsyncpa [#allocation3], 0
    %s11 = scalar_lea.sflag [#allocation3], 1
    %12 = vsyncpa %s11, 0
    %13 = vsyncpa [#allocation4], 0
    %s14 = scalar_lea.sflag [#allocation4], 1
    %15 = vsyncpa %s14, 0
    loop: start=0, step=1, limit=4
    $region2: #{tpu_custom_call.1} parent=1 // loop_pre_header
      _
    $region3: #{tpu_custom_call.1} parent=1 // loop_header
      %s17 = sphi 0, %s21
      %p18 = scmp.ge.s32.totalorder %s17, 4
      %s27 = sphi 0, %s29
      %s30 = sphi 0, %s27
      %s31 = sphi 0, %s30
      %s47 = sphi 0, %s31
      %s51 = sphi 0, %s51
      %s53 = sphi 0, %s51
      %s54 = sphi 0, %s53
      %s68 = sphi 0, %s54
      %s72 = sphi 0, %s72
      %s74 = sphi 0, %s72
      %s75 = sphi 0, %s74
      %s89 = sphi 0, %s75
      %s93 = sphi 0, %s93
      %s95 = sphi 0, %s93
      %s96 = sphi 0, %s95
      %s110 = sphi 0, %s96
      %s114 = sphi 0, %s114
      %s116 = sphi 0, %s114
      %s117 = sphi 0, %s116
      %s131 = sphi 0, %s117
      %s137 = sphi 0, %s139
      %s140 = sphi 0, %s137
      %s141 = sphi 0, %s140
      %s157 = sphi 0, %s141
    $region4: #{tpu_custom_call.1} parent=1 // loop_header_branch
      %20 = sbr.rel (%p18) target = $region8
    $region5: #{tpu_custom_call.1} parent=1 // loop_body
      %s22 = ssub.s32 %s17, 1
      %s23 = ssub.s32 %s17, 2
      %s24 = sadd.s32 %s17, 1
      %s25 = ssub.s32 %s17, %s24
      %p26 = scmp.eq.s32.totalorder %s25, 0
      %s28 = sadd.s32 %s27, 1
      %s29 = scalar_select %p26, %s27, %s28
      %p32 = pneg %p26
      %p33 = scmp.eq.s32.totalorder %s17, 1
      %p34 = por %p32, %p33
      %p35 = scmp.ne.s32.totalorder %s27, %s30
      %p36 = scmp.eq.s32.totalorder %s17, 0
      %p37 = por %p35, %p36
      %p38 = scmp.ne.s32.totalorder %s27, %s30
      %p39 = scmp.eq.s32.totalorder %s22, 1
      %p40 = por %p38, %p39
      %p41 = scmp.ne.s32.totalorder %s30, %s31
      %p42 = scmp.eq.s32.totalorder %s22, 0
      %p43 = por %p41, %p42
      %p44 = scmp.ne.s32.totalorder %s30, %s31
      %p45 = scmp.eq.s32.totalorder %s23, 1
      %p46 = por %p44, %p45
      %p48 = scmp.ne.s32.totalorder %s31, %s47
      %p49 = scmp.eq.s32.totalorder %s23, 0
      %p50 = por %p48, %p49
      %s52 = sadd.s32 %s51, 1
      %p55 = scmp.eq.s32.totalorder %s17, 1
      %p56 = scmp.ne.s32.totalorder %s51, %s53
      %p57 = scmp.eq.s32.totalorder %s17, 0
      %p58 = por %p56, %p57
      %p59 = scmp.ne.s32.totalorder %s51, %s53
      %p60 = scmp.eq.s32.totalorder %s22, 1
      %p61 = por %p59, %p60
      %p62 = scmp.ne.s32.totalorder %s53, %s54
      %p63 = scmp.eq.s32.totalorder %s22, 0
      %p64 = por %p62, %p63
      %p65 = scmp.ne.s32.totalorder %s53, %s54
      %p66 = scmp.eq.s32.totalorder %s23, 1
      %p67 = por %p65, %p66
      %p69 = scmp.ne.s32.totalorder %s54, %s68
      %p70 = scmp.eq.s32.totalorder %s23, 0
      %p71 = por %p69, %p70
      %s73 = sadd.s32 %s72, 1
      %p76 = scmp.eq.s32.totalorder %s17, 1
      %p77 = scmp.ne.s32.totalorder %s72, %s74
      %p78 = scmp.eq.s32.totalorder %s17, 0
      %p79 = por %p77, %p78
      %p80 = scmp.ne.s32.totalorder %s72, %s74
      %p81 = scmp.eq.s32.totalorder %s22, 1
      %p82 = por %p80, %p81
      %p83 = scmp.ne.s32.totalorder %s74, %s75
      %p84 = scmp.eq.s32.totalorder %s22, 0
      %p85 = por %p83, %p84
      %p86 = scmp.ne.s32.totalorder %s74, %s75
      %p87 = scmp.eq.s32.totalorder %s23, 1
      %p88 = por %p86, %p87
      %p90 = scmp.ne.s32.totalorder %s75, %s89
      %p91 = scmp.eq.s32.totalorder %s23, 0
      %p92 = por %p90, %p91
      %s94 = sadd.s32 %s93, 1
      %p97 = scmp.eq.s32.totalorder %s17, 1
      %p98 = scmp.ne.s32.totalorder %s93, %s95
      %p99 = scmp.eq.s32.totalorder %s17, 0
      %p100 = por %p98, %p99
      %p101 = scmp.ne.s32.totalorder %s93, %s95
      %p102 = scmp.eq.s32.totalorder %s22, 1
      %p103 = por %p101, %p102
      %p104 = scmp.ne.s32.totalorder %s95, %s96
      %p105 = scmp.eq.s32.totalorder %s22, 0
      %p106 = por %p104, %p105
      %p107 = scmp.ne.s32.totalorder %s95, %s96
      %p108 = scmp.eq.s32.totalorder %s23, 1
      %p109 = por %p107, %p108
      %p111 = scmp.ne.s32.totalorder %s96, %s110
      %p112 = scmp.eq.s32.totalorder %s23, 0
      %p113 = por %p111, %p112
      %s115 = sadd.s32 %s114, 1
      %p118 = scmp.eq.s32.totalorder %s17, 1
      %p119 = scmp.ne.s32.totalorder %s114, %s116
      %p120 = scmp.eq.s32.totalorder %s17, 0
      %p121 = por %p119, %p120
      %p122 = scmp.ne.s32.totalorder %s114, %s116
      %p123 = scmp.eq.s32.totalorder %s22, 1
      %p124 = por %p122, %p123
      %p125 = scmp.ne.s32.totalorder %s116, %s117
      %p126 = scmp.eq.s32.totalorder %s22, 0
      %p127 = por %p125, %p126
      %p128 = scmp.ne.s32.totalorder %s116, %s117
      %p129 = scmp.eq.s32.totalorder %s23, 1
      %p130 = por %p128, %p129
      %p132 = scmp.ne.s32.totalorder %s117, %s131
      %p133 = scmp.eq.s32.totalorder %s23, 0
      %p134 = por %p132, %p133
      %s135 = ssub.s32 %s17, %s24
      %p136 = scmp.eq.s32.totalorder %s135, 0
      %s138 = sadd.s32 %s137, 1
      %s139 = scalar_select %p136, %s137, %s138
      %p142 = pneg %p136
      %p143 = scmp.eq.s32.totalorder %s17, 1
      %p144 = por %p142, %p143
      %p145 = scmp.ne.s32.totalorder %s137, %s140
      %p146 = scmp.eq.s32.totalorder %s17, 0
      %p147 = por %p145, %p146
      %p148 = scmp.ne.s32.totalorder %s137, %s140
      %p149 = scmp.eq.s32.totalorder %s22, 1
      %p150 = por %p148, %p149
      %p151 = scmp.ne.s32.totalorder %s140, %s141
      %p152 = scmp.eq.s32.totalorder %s22, 0
      %p153 = por %p151, %p152
      %p154 = scmp.ne.s32.totalorder %s140, %s141
      %p155 = scmp.eq.s32.totalorder %s23, 1
      %p156 = por %p154, %p155
      %p158 = scmp.ne.s32.totalorder %s141, %s157
      %p159 = scmp.eq.s32.totalorder %s23, 0
      %p160 = por %p158, %p159
      %p161 = scmp.le.s32.totalorder 1, %s17
      %p162 = scmp.lt.s32.totalorder %s17, 3
      %p163 = pnand %p161, %p162
      %p164 = pneg %p163
      // Predicated region
      $region9: #{tpu_custom_call.1} parent=5 // pred_check
        _
      $region10: #{tpu_custom_call.1} parent=5 // pred_check_branch
        %166 = sbr.rel (%p163) target = $region12
      $region11: #{tpu_custom_call.1} parent=5 // pred_region
        %s167 = ssub.s32 %s17, 1
        // Predicated region
        $region13: #{tpu_custom_call.1} parent=11 // pred_check
          %p168 = pneg %p64
        $region14: #{tpu_custom_call.1} parent=11 // pred_check_branch
          %170 = sbr.rel (%p168) target = $region16
        $region15: #{tpu_custom_call.1} parent=11 // pred_region
          _
        $region16: #{tpu_custom_call.1} parent=11 // pred_fallthru
          _
        // Predicated region
        $region17: #{tpu_custom_call.1} parent=11 // pred_check
          %p171 = pneg %p85
        $region18: #{tpu_custom_call.1} parent=11 // pred_check_branch
          %173 = sbr.rel (%p171) target = $region20
        $region19: #{tpu_custom_call.1} parent=11 // pred_region
          _
        $region20: #{tpu_custom_call.1} parent=11 // pred_fallthru
          _
        // Predicated region
        $region21: #{tpu_custom_call.1} parent=11 // pred_check
          %p174 = pneg %p106
        $region22: #{tpu_custom_call.1} parent=11 // pred_check_branch
          %176 = sbr.rel (%p174) target = $region24
        $region23: #{tpu_custom_call.1} parent=11 // pred_region
          _
        $region24: #{tpu_custom_call.1} parent=11 // pred_fallthru
          _
        // Predicated region
        $region25: #{tpu_custom_call.1} parent=11 // pred_check
          %p177 = pneg %p127
        $region26: #{tpu_custom_call.1} parent=11 // pred_check_branch
          %179 = sbr.rel (%p177) target = $region28
        $region27: #{tpu_custom_call.1} parent=11 // pred_region
          _
        $region28: #{tpu_custom_call.1} parent=11 // pred_fallthru
          _
      $region12: #{tpu_custom_call.1} parent=5 // pred_fallthru
        _
      %p180 = scmp.lt.s32.totalorder %s17, 2
      // Predicated region
      $region29: #{tpu_custom_call.1} parent=5 // pred_check
        %p181 = pneg %p180
      $region30: #{tpu_custom_call.1} parent=5 // pred_check_branch
        %183 = sbr.rel (%p181) target = $region32
      $region31: #{tpu_custom_call.1} parent=5 // pred_region
        // Predicated region
        $region33: #{tpu_custom_call.1} parent=31 // pred_check
          %p184 = pneg %p37
        $region34: #{tpu_custom_call.1} parent=31 // pred_check_branch
          %186 = sbr.rel (%p184) target = $region36
        $region35: #{tpu_custom_call.1} parent=31 // pred_region
          %s187 = sand.u32 %s27, 1
          %s188 = scalar_lea.sflag [#allocation3], %s187
          %s189 = sand.u32 %s27, 1
          %s190 = smul.addr %s189, 32
          %s191 = scalar_lea.vmem [#allocation2], %s190
          %193 = vsyncadd %s188, 0
          %s194 = smul.addr %s17, 4
          %s195 = smul.addr %s194, 8
          %s196 = scalar_lea.hbm %s0, %s195
          %s197 = sshll.u32 %s196, 4
          %s198 = int_to_ptr.hbm [resolvable:$true] %s197
          %s199 = sshll.u32 %s191, 4
          %s200 = int_to_ptr.vmem [resolvable:$true] %s199
          %205 = dma.hbm_to_vmem [thread:$0]  %s198, 512, %s200, %s188, 128, 128, 8
        $region36: #{tpu_custom_call.1} parent=31 // pred_fallthru
          _
      $region32: #{tpu_custom_call.1} parent=5 // pred_fallthru
        _
      %p206 = scmp.le.s32.totalorder 1, %s17
      %p207 = scmp.lt.s32.totalorder %s17, 3
      %p208 = pnand %p206, %p207
      %p209 = pneg %p208
      // Predicated region
      $region37: #{tpu_custom_call.1} parent=5 // pred_check
        _
      $region38: #{tpu_custom_call.1} parent=5 // pred_check_branch
        %211 = sbr.rel (%p208) target = $region40
      $region39: #{tpu_custom_call.1} parent=5 // pred_region
        %s212 = ssub.s32 %s17, 1
        %s213 = sand.u32 %s30, 1
        %s214 = scalar_lea.sflag [#allocation3], %s213
        %s215 = sand.u32 %s30, 1
        %s216 = smul.addr %s215, 32
        %s217 = scalar_lea.vmem [#allocation2], %s216
        // Predicated region
        $region41: #{tpu_custom_call.1} parent=39 // pred_check
          %p218 = pneg %p43
        $region42: #{tpu_custom_call.1} parent=39 // pred_check_branch
          %220 = sbr.rel (%p218) target = $region44
        $region43: #{tpu_custom_call.1} parent=39 // pred_region
          %222 = dma.done %s214, 512
        $region44: #{tpu_custom_call.1} parent=39 // pred_fallthru
          _
        %s223 = sand.u32 %s30, 1
        %s224 = scalar_lea.sflag [#allocation3], %s223
        %s225 = sand.u32 %s30, 1
        %s226 = smul.addr %s225, 32
        %s227 = scalar_lea.vmem [#allocation2], %s226
        %p228 = pneg %p43
        %p229 = pneg %p40
        %p230 = pneg %p64
        %p231 = pneg %p61
        %p232 = pneg %p85
        %p233 = pneg %p82
        %p234 = pneg %p106
        %p235 = pneg %p103
        %p236 = pneg %p127
        %p237 = pneg %p124
        %p238 = pneg %p153
        %p239 = pneg %p150
        %s240 = sand.u32 %s140, 1
        %s241 = scalar_lea.sflag [#allocation4], %s240
        %s242 = sand.u32 %s140, 1
        %s243 = smul.addr %s242, 32
        %s244 = scalar_lea.vmem [#allocation5], %s243
        %v245 = vld [vmem:[%s217] sm:$0xff]
        %v246 = vld [vmem:[%s217 + $0x8] sm:$0xff]
        %v247 = vld [vmem:[%s217 + $0x10] sm:$0xff]
        %v248 = vld [vmem:[%s217 + $0x18] sm:$0xff]
        %vm249 = vcmask 523264
        %v250 = vsel %vm249, %v245, 0.0
        %251 = vadd.xlane.f32.xlu0 %v250
        %v252 = vpop.xlane.xlu0 %251
        %v253 = vsel %vm249, %v246, 0.0
        %254 = vadd.xlane.f32.xlu0 %v253
        %v255 = vpop.xlane.xlu0 %254
        %v256 = vsel %vm249, %v247, 0.0
        %257 = vadd.xlane.f32.xlu0 %v256
        %v258 = vpop.xlane.xlu0 %257
        %v259 = vsel %vm249, %v248, 0.0
        %260 = vadd.xlane.f32.xlu0 %v259
        %v261 = vpop.xlane.xlu0 %260
        %v262 = vmul.f32 %v252, 0.015625
        %v263 = vmul.f32 %v255, 0.015625
        %v264 = vmul.f32 %v258, 0.015625
        %v265 = vmul.f32 %v261, 0.015625
        %v266 = vld [vmem:[%s1] sm:$0xff]
        %v267 = vld [vmem:[%s1 + $0x8] sm:$0xff]
        %v268 = vld [vmem:[%s1 + $0x10] sm:$0xff]
        %v269 = vld [vmem:[%s1 + $0x18] sm:$0xff]
        %v270 = vld [vmem:[%s2] sm:$0x1]
        %v275 = vlaneseq
        %v276 = vand.u32 %v275, 127
        %v277 = vperm.slane %v262, %v276
        %v278 = vadd.s32 %v276, 4294967288
        %v279 = vperm.slane %v263, %v278
        %vm280 = vcmask 130112
        %v281 = vsel %vm280, %v279, %v277
        %v282 = vadd.s32 %v276, 4294967280
        %v283 = vperm.slane %v264, %v282
        %vm284 = vcmask 195712
        %v285 = vsel %vm284, %v283, %v281
        %v286 = vadd.s32 %v276, 4294967272
        %v287 = vperm.slane %v265, %v286
        %vm288 = vcmask 261312
        %v289 = vsel %vm288, %v287, %v285
        %vm290 = vcmask 261120
        %v291 = vsel %vm290, %v289, 0
        %293 = vmatpush.msra.mxu0 0.0
        %294 = vmatpush.msra.mxu0 0.0
        %295 = vmatpush.msra.mxu0 0.0
        %296 = vmatpush.msra.mxu0 0.0
        %297 = vmatpush.msra.mxu0 0.0
        %298 = vmatpush.msra.mxu0 0.0
        %299 = vmatpush.msra.mxu0 0.0
        %300 = vmatpush.msra.mxu0 0.0
        %301 = vmatpush.msra.mxu0 0.0
        %302 = vmatpush.msra.mxu0 0.0
        %303 = vmatpush.msra.mxu0 0.0
        %304 = vmatpush.msra.mxu0 0.0
        %305 = vmatpush.msra.mxu0 %v269
        %306 = vmatpush.msra.mxu0 %v268
        %307 = vmatpush.msra.mxu0 %v267
        %308 = vmatpush.msra.mxu0 %v266
        %309 = vmatmul.f32.gmra.mxu0 %v291
        %v310 = vpop.f32.mrf.mxu0
        %v311 = vadd.f32 %v270, %v310
        %312 = vdwg.mxu0
        %v313 = vmax.f32 %v311, 0.0
        %v314 = vld [vmem:[%s3] sm:$0x3]
        %v315 = vld [vmem:[%s4] sm:$0x1]
        %vm316 = vcmask 15360
        %v318 = vsel %vm316, %v313, 0
        %vm320 = vcmask 1041408
        %v322 = vsel %vm320, %v314, 0
        %324 = vmatpush.msra.mxu0 0.0
        %325 = vmatpush.msra.mxu0 0.0
        %326 = vmatpush.msra.mxu0 0.0
        %327 = vmatpush.msra.mxu0 0.0
        %328 = vmatpush.msra.mxu0 0.0
        %329 = vmatpush.msra.mxu0 0.0
        %330 = vmatpush.msra.mxu0 0.0
        %331 = vmatpush.msra.mxu0 0.0
        %332 = vmatpush.msra.mxu0 0.0
        %333 = vmatpush.msra.mxu0 0.0
        %334 = vmatpush.msra.mxu0 0.0
        %335 = vmatpush.msra.mxu0 0.0
        %336 = vmatpush.msra.mxu0 0.0
        %337 = vmatpush.msra.mxu0 0.0
        %338 = vmatpush.msra.mxu0 0.0
        %339 = vmatpush.msra.mxu0 %v322
        %340 = vmatmul.f32.gmra.mxu0 %v318
        %v341 = vpop.f32.mrf.mxu0
        %v342 = vadd.f32 %v315, %v341
        %343 = vdwg.mxu0
        %v344 = vxor.u32 %v342, 2147483648
        %v345 = vmul.f32 %v344, 1.442695
        %v346 = vpow.pop %v345
        %v347 = vadd.f32 %v346, 1.0
        %v348 = vrcp.pop %v347
        %v349 = vmul.f32 %v347, %v348
        %v350 = vsub.f32 1.0, %v349
        %v351 = vmul.f32 %v348, %v350
        %v352 = vadd.f32 %v348, %v351
        %vm353 = vweird.f32 %v347
        %vm354 = vweird.f32 %v348
        %vm355 = vmor %vm353, %vm354
        %v356 = vsel %vm355, %v348, %v352
        %v357 = vand.u32 2147483647, %v347
        %vm358 = vcmp.eq.f32.partialorder %v357, 8.507059e+37
        %v359 = vand.u32 %v347, 2147483648
        %v360 = vor.u32 1.1754944e-38, %v359
        %v361 = vsel %vm358, %v360, %v356
        %v362 = vmul.f32 1.0, %v361
        %v363 = vperm.slane %v362, 0
        %v364 = vlaneseq
        %v365 = vshrl.u32 %v364, 7
        %367 = vset.pattern.permute.xlu0 %v365
        %368 = vperm.xlu0 %367, %v363
        %v369 = vpop.permute.xlu0 %368
        %v370 = vlaneseq
        %v371 = vshrl.u32 %v370, 7
        %v372 = vadd.s32 %v371, 8
        %373 = vset.pattern.permute.xlu0 %v372
        %374 = vperm.xlu0 %373, %v363
        %v375 = vpop.permute.xlu0 %374
        %v376 = vlaneseq
        %v377 = vshrl.u32 %v376, 7
        %v378 = vadd.s32 %v377, 16
        %379 = vset.pattern.permute.xlu0 %v378
        %380 = vperm.xlu0 %379, %v363
        %v381 = vpop.permute.xlu0 %380
        %v382 = vlaneseq
        %v383 = vshrl.u32 %v382, 7
        %v384 = vadd.s32 %v383, 24
        %385 = vset.pattern.permute.xlu0 %v384
        %386 = vperm.xlu0 %385, %v363
        %v387 = vpop.permute.xlu0 %386
        %v388 = vmul.f32 %v245, %v369
        %v389 = vmul.f32 %v246, %v375
        %v390 = vmul.f32 %v247, %v381
        %v391 = vmul.f32 %v248, %v387
        %392 = vst.msk [vmem:[%s244] sm:$0xff] %vm249, %v388
        %393 = vst.msk [vmem:[%s244 + $0x8] sm:$0xff] %vm249, %v389
        %394 = vst.msk [vmem:[%s244 + $0x10] sm:$0xff] %vm249, %v390
        %395 = vst.msk [vmem:[%s244 + $0x18] sm:$0xff] %vm249, %v391
        %s396 = sand.u32 %s140, 1
        %s397 = scalar_lea.sflag [#allocation4], %s396
        %s398 = sand.u32 %s140, 1
        %s399 = smul.addr %s398, 32
        %s400 = scalar_lea.vmem [#allocation5], %s399
        // Predicated region
        $region45: #{tpu_custom_call.1} parent=39 // pred_check
          %p401 = pneg %p150
        $region46: #{tpu_custom_call.1} parent=39 // pred_check_branch
          %403 = sbr.rel (%p401) target = $region48
        $region47: #{tpu_custom_call.1} parent=39 // pred_region
          %405 = vsyncadd %s397, 0
          %s406 = smul.addr %s22, 4
          %s407 = smul.addr %s406, 8
          %s408 = scalar_lea.hbm %s5, %s407
          %s409 = sshll.u32 %s400, 4
          %s410 = int_to_ptr.vmem [resolvable:$true] %s409
          %s411 = sshll.u32 %s408, 4
          %s412 = int_to_ptr.hbm [resolvable:$true] %s411
          %417 = dma.vmem_to_hbm [thread:$0]  %s410, 512, %s412, %s397, 128, 128, 8
        $region48: #{tpu_custom_call.1} parent=39 // pred_fallthru
          _
      $region40: #{tpu_custom_call.1} parent=5 // pred_fallthru
        _
      %p418 = scmp.le.s32.totalorder 2, %s17
      // Predicated region
      $region49: #{tpu_custom_call.1} parent=5 // pred_check
        %p419 = pneg %p418
      $region50: #{tpu_custom_call.1} parent=5 // pred_check_branch
        %421 = sbr.rel (%p419) target = $region52
      $region51: #{tpu_custom_call.1} parent=5 // pred_region
        %s422 = ssub.s32 %s17, 2
        // Predicated region
        $region53: #{tpu_custom_call.1} parent=51 // pred_check
          %p423 = pneg %p156
        $region54: #{tpu_custom_call.1} parent=51 // pred_check_branch
          %425 = sbr.rel (%p423) target = $region56
        $region55: #{tpu_custom_call.1} parent=51 // pred_region
          %s426 = sand.u32 %s141, 1
          %s427 = scalar_lea.sflag [#allocation4], %s426
          %s428 = sand.u32 %s141, 1
          %s429 = smul.addr %s428, 32
          %s430 = scalar_lea.vmem [#allocation5], %s429
          %432 = dma.done %s427, 512
        $region56: #{tpu_custom_call.1} parent=51 // pred_fallthru
          _
      $region52: #{tpu_custom_call.1} parent=5 // pred_fallthru
        _
    $region6: #{tpu_custom_call.1} parent=1 // loop_footer
      %s21 = sadd.s32 1, %s17
    $region7: #{tpu_custom_call.1} parent=1 // loop_footer_branch
      %16 = sbr.rel target = $region3
    $region8: #{tpu_custom_call.1} parent=1 // loop_exit
      _
    %433 = vsyncpa [#allocation3], 1
    %s434 = scalar_lea.sflag [#allocation3], 1
    %435 = vsyncpa %s434, 1
    %436 = vsyncpa [#allocation4], 1
    %s437 = scalar_lea.sflag [#allocation4], 1
    %438 = vsyncpa %s437, 1

</llo_original>
